<compile_context>
chip_gen: v7x
topology: tpu7x:2x2x1
jax: 0.10.0
libtpu: 0.0.40
codegen_flags: <defaults>
</compile_context>

<pallas_src>
import functools

import jax
import jax.numpy as jnp
from jax import lax
from jax.experimental import pallas as pl
from jax.experimental.pallas import tpu as pltpu

CLAMP_LO = -0.99
CLAMP_HI = 0.99
NEG_SLOPE = 0.2      # PyG GATConv default LeakyReLU negative slope
NEG_INF = -1e30
P = 128              # lane-dense padded feature width used inside the kernel


def _gatnet_kernel(x_ref, maskb_ref, cls_ref,
                   wcat_ref, adst_ref, asrc_ref, bias_ref,
                   o_ref, *, n_layers, bf16_softmax):
    x = x_ref[...]                                                     # (N, P) f32 node features
    maskb = maskb_ref[...].astype(jnp.float32)                         # one upcast, reused 3x

    for l in range(n_layers):                                          # statically unrolled layers
        # Fused reparam + GAT linear: one MXU matmul per layer, bf16 operands, f32 accumulate.
        hh = jnp.dot(x.astype(jnp.bfloat16), wcat_ref[l],
                     preferred_element_type=jnp.float32)               # (N, 2P)

        # Bregman reparametrization branch: clamp(x @ Wrep) then offset = atanh.
        x_off = jnp.clip(hh[:, :P], CLAMP_LO, CLAMP_HI)
        offset = 0.5 * jnp.log((1.0 + x_off) * pl.reciprocal(1.0 - x_off, approx=False))

        h = hh[:, P:]                                                  # (N, P) GAT features

        # Attention logits e[i, j] = LeakyReLU(a_dst[i] + a_src[j]).
        a_dst = jnp.sum(h * adst_ref[l], axis=-1, keepdims=True)       # (N, 1) VPU mul + XLU reduce
        # NOTE(audit): degenerate (1,P)x(P,N) matvec — if lower_as_mlir ever shows a materialised
        # h^T, switch to a VPU reduce -> skinny (N,1) transpose instead.
        a_src = lax.dot_general(asrc_ref[l], h, (((1,), (1,)), ((), ())),
                                preferred_element_type=jnp.float32)    # (1, N)
        e = a_dst + a_src                                              # (N, N)
        e = jnp.maximum(e, NEG_SLOPE * e)                              # leaky relu via max (2 VALU ops)
        e = e + maskb                                                  # additive -inf off-edge bias

        # Masked softmax over source nodes j (incoming edges of each target i).
        e = e - jnp.max(e, axis=-1, keepdims=True)
        if bf16_softmax:
            # v6e/v7x: bf16 EUP/VPU on the N^2 phase; alpha goes to the MXU without a later cast.
            p = jnp.exp(e.astype(jnp.bfloat16))
            denom = jnp.sum(p, axis=-1, keepdims=True, dtype=jnp.float32)
            alpha = p * pl.reciprocal(denom, approx=True).astype(jnp.bfloat16)
        else:
            # v5e: no bf16 VPU/EUP — keep elementwise math in f32.
            p = jnp.exp(e)
            denom = jnp.sum(p, axis=-1, keepdims=True)
            alpha = (p * pl.reciprocal(denom, approx=True)).astype(jnp.bfloat16)

        gat = jnp.dot(alpha, h.astype(jnp.bfloat16),
                      preferred_element_type=jnp.float32) + bias_ref[l]  # (N, P)

        # Bregman update: activation(offset(x_off) + GATConv(x)); activation = tanh. Dropout = id.
        x = jnp.tanh(offset + gat)

    # Fused log_softmax epilogue (padded class columns masked to -inf via cls bias).
    s = x + cls_ref[...]
    s = s - jnp.max(s, axis=-1, keepdims=True)
    o_ref[...] = s - jnp.log(jnp.sum(jnp.exp(s), axis=-1, keepdims=True))


def _pad2(a, rows, cols):
    return jnp.zeros((rows, cols), a.dtype).at[:a.shape[0], :a.shape[1]].set(a)


def pack_gatnet_params(reps, gat_layers):
    """Stack + pad per-layer params for the fused kernel.

    reps:       3 reparam weights, each (Fin, Fout) in x @ W layout (identity layer = eye).
    gat_layers: 3 tuples (wlin (Fin, Fout), att_dst (1, Fout), att_src (1, Fout), bias (1, Fout)).
    Returns (wcat (3, P, 2P) bf16, att_dst (3, 1, P), att_src (3, 1, P), bias (3, 1, P)).
    """
    wcats, adsts, asrcs, biases = [], [], [], []
    for wrep, (wlin, att_dst, att_src, bias) in zip(reps, gat_layers):
        wcat = jnp.concatenate([_pad2(wrep, P, P), _pad2(wlin, P, P)], axis=1)
        wcats.append(wcat.astype(jnp.bfloat16))
        adsts.append(_pad2(att_dst, 1, P))
        asrcs.append(_pad2(att_src, 1, P))
        biases.append(_pad2(bias, 1, P))
    return (jnp.stack(wcats), jnp.stack(adsts), jnp.stack(asrcs), jnp.stack(biases))


def _device_kind():
    try:
        return jax.devices()[0].device_kind.lower()
    except Exception:  # pragma: no cover - defensive; default to the conservative f32 path
        return ""


def _vmem_limit_bytes(n, is_v7):
    """Size-aware scoped-VMEM limit (whole-array resident design, no double-buffering)."""
    resident = (n * P * 4                     # x_pad
                + n * n * 2                   # bf16 mask bias
                + P * 4                       # class-mask bias
                + 3 * P * (2 * P) * 2         # packed Wrep|Wlin (bf16)
                + 3 * 3 * P * 4               # att_dst / att_src / bias rows
                + n * P * 4)                  # output
    temps = (n * (2 * P) * 4                  # hh
             + 4 * n * n * 4                  # e / p / alpha worst case
             + 5 * n * P * 4)                 # offset / h / gat / epilogue temporaries
    need = 2 * (resident + temps) + (4 << 20)
    cap = (56 << 20) if is_v7 else (100 << 20)   # leave headroom under 64 MiB physical on v7x
    return int(min(max(need, 32 << 20), cap))


@functools.partial(jax.jit, static_argnames=("num_classes",))
def gatnet_forward(x, mask, params, *, num_classes):
    """x: (N, F) node features; mask: (N, N) with mask[i, j] = 1 iff edge j -> i (incl. self loops)."""
    wcat, att_dst, att_src, bias = params
    n = x.shape[0]
    n_layers = wcat.shape[0]

    kind = _device_kind()
    bf16_softmax = ("v6" in kind) or ("v7" in kind) or ("7x" in kind)   # bf16 VPU/EUP generations
    is_v7 = ("v7" in kind) or ("7x" in kind)

    x_pad = _pad2(x, n, P)
    # bf16 additive -inf off-edge bias: half the HBM DMA / VMEM of the dominant (N,N) operand.
    mask_bias = ((1.0 - mask) * NEG_INF).astype(jnp.bfloat16)
    cls_bias = jnp.where(jnp.arange(P) < num_classes, 0.0, NEG_INF).astype(jnp.float32).reshape(1, P)

    flops = n_layers * (2 * n * P * (2 * P) + 2 * n * n * P + 2 * n * P + 6 * n * n)
    transcendentals = n_layers * (n * n + 2 * n * P) + 2 * n * P
    bytes_accessed = (x_pad.size * 4 + mask_bias.size * 2 + cls_bias.size * 4
                      + wcat.size * 2 + (att_dst.size + att_src.size + bias.size) * 4
                      + n * P * 4)

    vmem = pltpu.MemorySpace.VMEM
    out_pad = pl.pallas_call(
        functools.partial(_gatnet_kernel, n_layers=n_layers, bf16_softmax=bf16_softmax),
        out_shape=jax.ShapeDtypeStruct((n, P), jnp.float32),
        in_specs=[pl.BlockSpec(memory_space=vmem) for _ in range(7)],   # whole arrays, single-buffered
        out_specs=pl.BlockSpec(memory_space=vmem),
        compiler_params=pltpu.CompilerParams(
            vmem_limit_bytes=_vmem_limit_bytes(n, is_v7)),
        cost_estimate=pl.CostEstimate(flops=flops, transcendentals=transcendentals,
                                      bytes_accessed=bytes_accessed),
    )(x_pad, mask_bias, cls_bias, wcat, att_dst, att_src, bias)

    return out_pad[:, :num_classes]


def projection_simplex(v, radius=1.0):
    """Row-wise Euclidean projection onto the probability simplex (plain-JAX parameter glue)."""
    n, d = v.shape
    u = jnp.sort(v, axis=1)[:, ::-1]
    css = jnp.cumsum(u, axis=1) - radius
    ind = jnp.arange(1, d + 1, dtype=v.dtype)
    cond = (u - css / ind) > 0
    rho = jnp.sum(cond, axis=1)
    theta = css[jnp.arange(n), rho - 1] / rho.astype(v.dtype)
    return jnp.maximum(v - theta[:, None], 0.0)


def gat_conv_params(key, fin, fout):
    """heads=1 GATConv params, glorot-style init; bias zeros (PyG default). att vectors as rows."""
    k1, k2, k3 = jax.random.split(key, 3)
    g_lin = jnp.sqrt(6.0 / (fin + fout))
    wlin = jax.random.uniform(k1, (fin, fout), jnp.float32, -g_lin, g_lin)
    g_att = jnp.sqrt(6.0 / (1 + fout))
    att_src = jax.random.uniform(k2, (1, fout), jnp.float32, -g_att, g_att)
    att_dst = jax.random.uniform(k3, (1, fout), jnp.float32, -g_att, g_att)
    bias = jnp.zeros((1, fout), jnp.float32)
    return wlin, att_dst, att_src, bias


if __name__ == "__main__":
    N, F, H, C = 16, 8, 16, 4   # nodes, num_features, nhid, num_classes
    key = jax.random.PRNGKey(0)
    ks = jax.random.split(key, 6)

    x = jax.random.normal(ks[0], (N, F), jnp.float32)

    # bidirectional ring graph, edge_index = [source; target], shape (2, 2N)
    idx = jnp.arange(N)
    src = jnp.concatenate([idx, (idx + 1) % N])
    dst = jnp.concatenate([(idx + 1) % N, idx])
    edge_index = jnp.stack([src, dst])

    # dense adjacency mask: mask[i, j] = 1 if edge j -> i, plus self loops (add_self_loops=True)
    mask = jnp.zeros((N, N), jnp.float32)
    mask = mask.at[edge_index[1], edge_index[0]].set(1.0)
    mask = mask.at[idx, idx].set(1.0)

    # reparametrization: simplex-projected Linear (no bias), Identity, simplex-projected Linear
    w0 = jax.random.uniform(ks[1], (H, F), jnp.float32, -1.0 / jnp.sqrt(F), 1.0 / jnp.sqrt(F))
    w2 = jax.random.uniform(ks[2], (C, H), jnp.float32, -1.0 / jnp.sqrt(H), 1.0 / jnp.sqrt(H))
    rep0 = projection_simplex(w0).T        # (F, H): torch weight rows projected onto simplex
    rep1 = jnp.eye(H, dtype=jnp.float32)   # nn.Identity()
    rep2 = projection_simplex(w2).T        # (H, C)

    l0 = gat_conv_params(ks[3], F, H)
    l1 = gat_conv_params(ks[4], H, H)
    l2 = gat_conv_params(ks[5], H, C)

    params = pack_gatnet_params([rep0, rep1, rep2], [l0, l1, l2])
    out = gatnet_forward(x, mask, params, num_classes=C)
    out = jax.block_until_ready(out)
    assert out.shape == (N, C)
    assert bool(jnp.all(jnp.isfinite(out)))
    print("KERNEL_OK")
</pallas_src>

<mosaic_0001>
module attributes {stable_mosaic.version = 11 : i64} {
  func.func @_gatnet_kernel(%arg0: memref<16x128xf32, #tpu.memory_space<vmem>>, %arg1: memref<16x16xbf16, #tpu.memory_space<vmem>>, %arg2: memref<1x128xf32, #tpu.memory_space<vmem>>, %arg3: memref<3x128x256xbf16, #tpu.memory_space<vmem>>, %arg4: memref<3x1x128xf32, #tpu.memory_space<vmem>>, %arg5: memref<3x1x128xf32, #tpu.memory_space<vmem>>, %arg6: memref<3x1x128xf32, #tpu.memory_space<vmem>>, %arg7: memref<16x128xf32, #tpu.memory_space<vmem>>) attributes {dimension_semantics = [], scalar_prefetch = 0 : i64, scratch_operands = 0 : i64, tpu.core_type = #tpu.core_type<tc>} {
    %c0 = arith.constant 0 : index
    %c0_0 = arith.constant 0 : index
    %0 = vector.load %arg0[%c0, %c0_0] : memref<16x128xf32, #tpu.memory_space<vmem>>, vector<16x128xf32>
    %c0_1 = arith.constant 0 : index
    %c0_2 = arith.constant 0 : index
    %1 = vector.load %arg1[%c0_1, %c0_2] : memref<16x16xbf16, #tpu.memory_space<vmem>>, vector<16x16xbf16>
    %2 = arith.extf %1 : vector<16x16xbf16> to vector<16x16xf32>
    %3 = arith.truncf %0 : vector<16x128xf32> to vector<16x128xbf16>
    %c0_3 = arith.constant 0 : index
    %c0_4 = arith.constant 0 : index
    %c0_5 = arith.constant 0 : index
    %4 = vector.load %arg3[%c0_3, %c0_4, %c0_5] : memref<3x128x256xbf16, #tpu.memory_space<vmem>>, vector<1x128x256xbf16>
    %5 = vector.shape_cast %4 : vector<1x128x256xbf16> to vector<128x256xbf16>
    %cst = arith.constant dense<0.000000e+00> : vector<16x256xf32>
    %6 = tpu.matmul %3, %5, %cst {dimension_numbers = #tpu.dot_dimension_numbers<[1], [0], [0], [1], [0, 0, 1, 1], [], []>} : vector<16x128xbf16>, vector<128x256xbf16>, vector<16x256xf32> -> vector<16x256xf32>
    %7 = vector.extract_strided_slice %6 {offsets = [0, 0], sizes = [16, 128], strides = [1, 1]} : vector<16x256xf32> to vector<16x128xf32>
    %cst_6 = arith.constant -9.900000e-01 : f32
    %cst_7 = arith.constant 9.900000e-01 : f32
    %8 = vector.broadcast %cst_6 : f32 to vector<16x128xf32>
    %9 = arith.maximumf %8, %7 : vector<16x128xf32>
    %10 = vector.broadcast %cst_7 : f32 to vector<16x128xf32>
    %11 = arith.minimumf %10, %9 : vector<16x128xf32>
    %cst_8 = arith.constant 1.000000e+00 : f32
    %12 = vector.broadcast %cst_8 : f32 to vector<16x128xf32>
    %13 = arith.addf %12, %11 : vector<16x128xf32>
    %cst_9 = arith.constant 1.000000e+00 : f32
    %14 = vector.broadcast %cst_9 : f32 to vector<16x128xf32>
    %15 = arith.subf %14, %11 : vector<16x128xf32>
    %16 = tpu.reciprocal %15 : vector<16x128xf32> -> vector<16x128xf32>
    %17 = arith.mulf %13, %16 : vector<16x128xf32>
    %18 = math.log %17 : vector<16x128xf32>
    %cst_10 = arith.constant 5.000000e-01 : f32
    %19 = vector.broadcast %cst_10 : f32 to vector<16x128xf32>
    %20 = arith.mulf %19, %18 : vector<16x128xf32>
    %21 = vector.extract_strided_slice %6 {offsets = [0, 128], sizes = [16, 128], strides = [1, 1]} : vector<16x256xf32> to vector<16x128xf32>
    %c0_11 = arith.constant 0 : index
    %c0_12 = arith.constant 0 : index
    %c0_13 = arith.constant 0 : index
    %22 = vector.load %arg4[%c0_11, %c0_12, %c0_13] : memref<3x1x128xf32, #tpu.memory_space<vmem>>, vector<1x1x128xf32>
    %23 = vector.shape_cast %22 : vector<1x1x128xf32> to vector<1x128xf32>
    %24 = vector.broadcast %23 : vector<1x128xf32> to vector<16x128xf32>
    %25 = arith.mulf %21, %24 : vector<16x128xf32>
    %cst_14 = arith.constant dense<0.000000e+00> : vector<16xf32>
    %26 = vector.multi_reduction <add>, %25, %cst_14 [1] : vector<16x128xf32> to vector<16xf32>
    %27 = vector.shape_cast %26 : vector<16xf32> to vector<16x1xf32>
    %c0_15 = arith.constant 0 : index
    %c0_16 = arith.constant 0 : index
    %c0_17 = arith.constant 0 : index
    %28 = vector.load %arg5[%c0_15, %c0_16, %c0_17] : memref<3x1x128xf32, #tpu.memory_space<vmem>>, vector<1x1x128xf32>
    %29 = vector.shape_cast %28 : vector<1x1x128xf32> to vector<1x128xf32>
    %cst_18 = arith.constant dense<0.000000e+00> : vector<1x16xf32>
    %30 = tpu.matmul %29, %21, %cst_18 {dimension_numbers = #tpu.dot_dimension_numbers<[1], [1], [0], [0], [0, 0, 1, 0], [], []>} : vector<1x128xf32>, vector<16x128xf32>, vector<1x16xf32> -> vector<1x16xf32>
    %31 = vector.broadcast %27 : vector<16x1xf32> to vector<16x16xf32>
    %32 = vector.broadcast %30 : vector<1x16xf32> to vector<16x16xf32>
    %33 = arith.addf %31, %32 : vector<16x16xf32>
    %cst_19 = arith.constant 2.000000e-01 : f32
    %34 = vector.broadcast %cst_19 : f32 to vector<16x16xf32>
    %35 = arith.mulf %34, %33 : vector<16x16xf32>
    %36 = arith.maximumf %33, %35 : vector<16x16xf32>
    %37 = arith.addf %36, %2 : vector<16x16xf32>
    %cst_20 = arith.constant dense<0xFF800000> : vector<16xf32>
    %38 = vector.multi_reduction <maximumf>, %37, %cst_20 [1] : vector<16x16xf32> to vector<16xf32>
    %39 = vector.shape_cast %38 : vector<16xf32> to vector<16x1xf32>
    %40 = vector.broadcast %39 : vector<16x1xf32> to vector<16x16xf32>
    %41 = arith.subf %37, %40 : vector<16x16xf32>
    %42 = math.exp %41 : vector<16x16xf32>
    %cst_21 = arith.constant dense<0.000000e+00> : vector<16xf32>
    %43 = vector.multi_reduction <add>, %42, %cst_21 [1] : vector<16x16xf32> to vector<16xf32>
    %44 = vector.shape_cast %43 : vector<16xf32> to vector<16x1xf32>
    %45 = tpu.reciprocal %44 {approx = true} : vector<16x1xf32> -> vector<16x1xf32>
    %46 = vector.broadcast %45 : vector<16x1xf32> to vector<16x16xf32>
    %47 = arith.mulf %42, %46 : vector<16x16xf32>
    %48 = arith.truncf %47 : vector<16x16xf32> to vector<16x16xbf16>
    %49 = arith.truncf %21 : vector<16x128xf32> to vector<16x128xbf16>
    %cst_22 = arith.constant dense<0.000000e+00> : vector<16x128xf32>
    %50 = tpu.matmul %48, %49, %cst_22 {dimension_numbers = #tpu.dot_dimension_numbers<[1], [0], [0], [1], [0, 0, 1, 1], [], []>} : vector<16x16xbf16>, vector<16x128xbf16>, vector<16x128xf32> -> vector<16x128xf32>
    %c0_23 = arith.constant 0 : index
    %c0_24 = arith.constant 0 : index
    %c0_25 = arith.constant 0 : index
    %51 = vector.load %arg6[%c0_23, %c0_24, %c0_25] : memref<3x1x128xf32, #tpu.memory_space<vmem>>, vector<1x1x128xf32>
    %52 = vector.shape_cast %51 : vector<1x1x128xf32> to vector<1x128xf32>
    %53 = vector.broadcast %52 : vector<1x128xf32> to vector<16x128xf32>
    %54 = arith.addf %50, %53 : vector<16x128xf32>
    %55 = arith.addf %20, %54 : vector<16x128xf32>
    %56 = math.tanh %55 : vector<16x128xf32>
    %57 = arith.truncf %56 : vector<16x128xf32> to vector<16x128xbf16>
    %c1 = arith.constant 1 : index
    %c0_26 = arith.constant 0 : index
    %c0_27 = arith.constant 0 : index
    %58 = vector.load %arg3[%c1, %c0_26, %c0_27] : memref<3x128x256xbf16, #tpu.memory_space<vmem>>, vector<1x128x256xbf16>
    %59 = vector.shape_cast %58 : vector<1x128x256xbf16> to vector<128x256xbf16>
    %cst_28 = arith.constant dense<0.000000e+00> : vector<16x256xf32>
    %60 = tpu.matmul %57, %59, %cst_28 {dimension_numbers = #tpu.dot_dimension_numbers<[1], [0], [0], [1], [0, 0, 1, 1], [], []>} : vector<16x128xbf16>, vector<128x256xbf16>, vector<16x256xf32> -> vector<16x256xf32>
    %61 = vector.extract_strided_slice %60 {offsets = [0, 0], sizes = [16, 128], strides = [1, 1]} : vector<16x256xf32> to vector<16x128xf32>
    %cst_29 = arith.constant -9.900000e-01 : f32
    %cst_30 = arith.constant 9.900000e-01 : f32
    %62 = vector.broadcast %cst_29 : f32 to vector<16x128xf32>
    %63 = arith.maximumf %62, %61 : vector<16x128xf32>
    %64 = vector.broadcast %cst_30 : f32 to vector<16x128xf32>
    %65 = arith.minimumf %64, %63 : vector<16x128xf32>
    %cst_31 = arith.constant 1.000000e+00 : f32
    %66 = vector.broadcast %cst_31 : f32 to vector<16x128xf32>
    %67 = arith.addf %66, %65 : vector<16x128xf32>
    %cst_32 = arith.constant 1.000000e+00 : f32
    %68 = vector.broadcast %cst_32 : f32 to vector<16x128xf32>
    %69 = arith.subf %68, %65 : vector<16x128xf32>
    %70 = tpu.reciprocal %69 : vector<16x128xf32> -> vector<16x128xf32>
    %71 = arith.mulf %67, %70 : vector<16x128xf32>
    %72 = math.log %71 : vector<16x128xf32>
    %cst_33 = arith.constant 5.000000e-01 : f32
    %73 = vector.broadcast %cst_33 : f32 to vector<16x128xf32>
    %74 = arith.mulf %73, %72 : vector<16x128xf32>
    %75 = vector.extract_strided_slice %60 {offsets = [0, 128], sizes = [16, 128], strides = [1, 1]} : vector<16x256xf32> to vector<16x128xf32>
    %c1_34 = arith.constant 1 : index
    %c0_35 = arith.constant 0 : index
    %c0_36 = arith.constant 0 : index
    %76 = vector.load %arg4[%c1_34, %c0_35, %c0_36] : memref<3x1x128xf32, #tpu.memory_space<vmem>>, vector<1x1x128xf32>
    %77 = vector.shape_cast %76 : vector<1x1x128xf32> to vector<1x128xf32>
    %78 = vector.broadcast %77 : vector<1x128xf32> to vector<16x128xf32>
    %79 = arith.mulf %75, %78 : vector<16x128xf32>
    %cst_37 = arith.constant dense<0.000000e+00> : vector<16xf32>
    %80 = vector.multi_reduction <add>, %79, %cst_37 [1] : vector<16x128xf32> to vector<16xf32>
    %81 = vector.shape_cast %80 : vector<16xf32> to vector<16x1xf32>
    %c1_38 = arith.constant 1 : index
    %c0_39 = arith.constant 0 : index
    %c0_40 = arith.constant 0 : index
    %82 = vector.load %arg5[%c1_38, %c0_39, %c0_40] : memref<3x1x128xf32, #tpu.memory_space<vmem>>, vector<1x1x128xf32>
    %83 = vector.shape_cast %82 : vector<1x1x128xf32> to vector<1x128xf32>
    %cst_41 = arith.constant dense<0.000000e+00> : vector<1x16xf32>
    %84 = tpu.matmul %83, %75, %cst_41 {dimension_numbers = #tpu.dot_dimension_numbers<[1], [1], [0], [0], [0, 0, 1, 0], [], []>} : vector<1x128xf32>, vector<16x128xf32>, vector<1x16xf32> -> vector<1x16xf32>
    %85 = vector.broadcast %81 : vector<16x1xf32> to vector<16x16xf32>
    %86 = vector.broadcast %84 : vector<1x16xf32> to vector<16x16xf32>
    %87 = arith.addf %85, %86 : vector<16x16xf32>
    %cst_42 = arith.constant 2.000000e-01 : f32
    %88 = vector.broadcast %cst_42 : f32 to vector<16x16xf32>
    %89 = arith.mulf %88, %87 : vector<16x16xf32>
    %90 = arith.maximumf %87, %89 : vector<16x16xf32>
    %91 = arith.addf %90, %2 : vector<16x16xf32>
    %cst_43 = arith.constant dense<0xFF800000> : vector<16xf32>
    %92 = vector.multi_reduction <maximumf>, %91, %cst_43 [1] : vector<16x16xf32> to vector<16xf32>
    %93 = vector.shape_cast %92 : vector<16xf32> to vector<16x1xf32>
    %94 = vector.broadcast %93 : vector<16x1xf32> to vector<16x16xf32>
    %95 = arith.subf %91, %94 : vector<16x16xf32>
    %96 = math.exp %95 : vector<16x16xf32>
    %cst_44 = arith.constant dense<0.000000e+00> : vector<16xf32>
    %97 = vector.multi_reduction <add>, %96, %cst_44 [1] : vector<16x16xf32> to vector<16xf32>
    %98 = vector.shape_cast %97 : vector<16xf32> to vector<16x1xf32>
    %99 = tpu.reciprocal %98 {approx = true} : vector<16x1xf32> -> vector<16x1xf32>
    %100 = vector.broadcast %99 : vector<16x1xf32> to vector<16x16xf32>
    %101 = arith.mulf %96, %100 : vector<16x16xf32>
    %102 = arith.truncf %101 : vector<16x16xf32> to vector<16x16xbf16>
    %103 = arith.truncf %75 : vector<16x128xf32> to vector<16x128xbf16>
    %cst_45 = arith.constant dense<0.000000e+00> : vector<16x128xf32>
    %104 = tpu.matmul %102, %103, %cst_45 {dimension_numbers = #tpu.dot_dimension_numbers<[1], [0], [0], [1], [0, 0, 1, 1], [], []>} : vector<16x16xbf16>, vector<16x128xbf16>, vector<16x128xf32> -> vector<16x128xf32>
    %c1_46 = arith.constant 1 : index
    %c0_47 = arith.constant 0 : index
    %c0_48 = arith.constant 0 : index
    %105 = vector.load %arg6[%c1_46, %c0_47, %c0_48] : memref<3x1x128xf32, #tpu.memory_space<vmem>>, vector<1x1x128xf32>
    %106 = vector.shape_cast %105 : vector<1x1x128xf32> to vector<1x128xf32>
    %107 = vector.broadcast %106 : vector<1x128xf32> to vector<16x128xf32>
    %108 = arith.addf %104, %107 : vector<16x128xf32>
    %109 = arith.addf %74, %108 : vector<16x128xf32>
    %110 = math.tanh %109 : vector<16x128xf32>
    %111 = arith.truncf %110 : vector<16x128xf32> to vector<16x128xbf16>
    %c2 = arith.constant 2 : index
    %c0_49 = arith.constant 0 : index
    %c0_50 = arith.constant 0 : index
    %112 = vector.load %arg3[%c2, %c0_49, %c0_50] : memref<3x128x256xbf16, #tpu.memory_space<vmem>>, vector<1x128x256xbf16>
    %113 = vector.shape_cast %112 : vector<1x128x256xbf16> to vector<128x256xbf16>
    %cst_51 = arith.constant dense<0.000000e+00> : vector<16x256xf32>
    %114 = tpu.matmul %111, %113, %cst_51 {dimension_numbers = #tpu.dot_dimension_numbers<[1], [0], [0], [1], [0, 0, 1, 1], [], []>} : vector<16x128xbf16>, vector<128x256xbf16>, vector<16x256xf32> -> vector<16x256xf32>
    %115 = vector.extract_strided_slice %114 {offsets = [0, 0], sizes = [16, 128], strides = [1, 1]} : vector<16x256xf32> to vector<16x128xf32>
    %cst_52 = arith.constant -9.900000e-01 : f32
    %cst_53 = arith.constant 9.900000e-01 : f32
    %116 = vector.broadcast %cst_52 : f32 to vector<16x128xf32>
    %117 = arith.maximumf %116, %115 : vector<16x128xf32>
    %118 = vector.broadcast %cst_53 : f32 to vector<16x128xf32>
    %119 = arith.minimumf %118, %117 : vector<16x128xf32>
    %cst_54 = arith.constant 1.000000e+00 : f32
    %120 = vector.broadcast %cst_54 : f32 to vector<16x128xf32>
    %121 = arith.addf %120, %119 : vector<16x128xf32>
    %cst_55 = arith.constant 1.000000e+00 : f32
    %122 = vector.broadcast %cst_55 : f32 to vector<16x128xf32>
    %123 = arith.subf %122, %119 : vector<16x128xf32>
    %124 = tpu.reciprocal %123 : vector<16x128xf32> -> vector<16x128xf32>
    %125 = arith.mulf %121, %124 : vector<16x128xf32>
    %126 = math.log %125 : vector<16x128xf32>
    %cst_56 = arith.constant 5.000000e-01 : f32
    %127 = vector.broadcast %cst_56 : f32 to vector<16x128xf32>
    %128 = arith.mulf %127, %126 : vector<16x128xf32>
    %129 = vector.extract_strided_slice %114 {offsets = [0, 128], sizes = [16, 128], strides = [1, 1]} : vector<16x256xf32> to vector<16x128xf32>
    %c2_57 = arith.constant 2 : index
    %c0_58 = arith.constant 0 : index
    %c0_59 = arith.constant 0 : index
    %130 = vector.load %arg4[%c2_57, %c0_58, %c0_59] : memref<3x1x128xf32, #tpu.memory_space<vmem>>, vector<1x1x128xf32>
    %131 = vector.shape_cast %130 : vector<1x1x128xf32> to vector<1x128xf32>
    %132 = vector.broadcast %131 : vector<1x128xf32> to vector<16x128xf32>
    %133 = arith.mulf %129, %132 : vector<16x128xf32>
    %cst_60 = arith.constant dense<0.000000e+00> : vector<16xf32>
    %134 = vector.multi_reduction <add>, %133, %cst_60 [1] : vector<16x128xf32> to vector<16xf32>
    %135 = vector.shape_cast %134 : vector<16xf32> to vector<16x1xf32>
    %c2_61 = arith.constant 2 : index
    %c0_62 = arith.constant 0 : index
    %c0_63 = arith.constant 0 : index
    %136 = vector.load %arg5[%c2_61, %c0_62, %c0_63] : memref<3x1x128xf32, #tpu.memory_space<vmem>>, vector<1x1x128xf32>
    %137 = vector.shape_cast %136 : vector<1x1x128xf32> to vector<1x128xf32>
    %cst_64 = arith.constant dense<0.000000e+00> : vector<1x16xf32>
    %138 = tpu.matmul %137, %129, %cst_64 {dimension_numbers = #tpu.dot_dimension_numbers<[1], [1], [0], [0], [0, 0, 1, 0], [], []>} : vector<1x128xf32>, vector<16x128xf32>, vector<1x16xf32> -> vector<1x16xf32>
    %139 = vector.broadcast %135 : vector<16x1xf32> to vector<16x16xf32>
    %140 = vector.broadcast %138 : vector<1x16xf32> to vector<16x16xf32>
    %141 = arith.addf %139, %140 : vector<16x16xf32>
    %cst_65 = arith.constant 2.000000e-01 : f32
    %142 = vector.broadcast %cst_65 : f32 to vector<16x16xf32>
    %143 = arith.mulf %142, %141 : vector<16x16xf32>
    %144 = arith.maximumf %141, %143 : vector<16x16xf32>
    %145 = arith.addf %144, %2 : vector<16x16xf32>
    %cst_66 = arith.constant dense<0xFF800000> : vector<16xf32>
    %146 = vector.multi_reduction <maximumf>, %145, %cst_66 [1] : vector<16x16xf32> to vector<16xf32>
    %147 = vector.shape_cast %146 : vector<16xf32> to vector<16x1xf32>
    %148 = vector.broadcast %147 : vector<16x1xf32> to vector<16x16xf32>
    %149 = arith.subf %145, %148 : vector<16x16xf32>
    %150 = math.exp %149 : vector<16x16xf32>
    %cst_67 = arith.constant dense<0.000000e+00> : vector<16xf32>
    %151 = vector.multi_reduction <add>, %150, %cst_67 [1] : vector<16x16xf32> to vector<16xf32>
    %152 = vector.shape_cast %151 : vector<16xf32> to vector<16x1xf32>
    %153 = tpu.reciprocal %152 {approx = true} : vector<16x1xf32> -> vector<16x1xf32>
    %154 = vector.broadcast %153 : vector<16x1xf32> to vector<16x16xf32>
    %155 = arith.mulf %150, %154 : vector<16x16xf32>
    %156 = arith.truncf %155 : vector<16x16xf32> to vector<16x16xbf16>
    %157 = arith.truncf %129 : vector<16x128xf32> to vector<16x128xbf16>
    %cst_68 = arith.constant dense<0.000000e+00> : vector<16x128xf32>
    %158 = tpu.matmul %156, %157, %cst_68 {dimension_numbers = #tpu.dot_dimension_numbers<[1], [0], [0], [1], [0, 0, 1, 1], [], []>} : vector<16x16xbf16>, vector<16x128xbf16>, vector<16x128xf32> -> vector<16x128xf32>
    %c2_69 = arith.constant 2 : index
    %c0_70 = arith.constant 0 : index
    %c0_71 = arith.constant 0 : index
    %159 = vector.load %arg6[%c2_69, %c0_70, %c0_71] : memref<3x1x128xf32, #tpu.memory_space<vmem>>, vector<1x1x128xf32>
    %160 = vector.shape_cast %159 : vector<1x1x128xf32> to vector<1x128xf32>
    %161 = vector.broadcast %160 : vector<1x128xf32> to vector<16x128xf32>
    %162 = arith.addf %158, %161 : vector<16x128xf32>
    %163 = arith.addf %128, %162 : vector<16x128xf32>
    %164 = math.tanh %163 : vector<16x128xf32>
    %c0_72 = arith.constant 0 : index
    %c0_73 = arith.constant 0 : index
    %165 = vector.load %arg2[%c0_72, %c0_73] : memref<1x128xf32, #tpu.memory_space<vmem>>, vector<1x128xf32>
    %166 = vector.broadcast %165 : vector<1x128xf32> to vector<16x128xf32>
    %167 = arith.addf %164, %166 : vector<16x128xf32>
    %cst_74 = arith.constant dense<0xFF800000> : vector<16xf32>
    %168 = vector.multi_reduction <maximumf>, %167, %cst_74 [1] : vector<16x128xf32> to vector<16xf32>
    %169 = vector.shape_cast %168 : vector<16xf32> to vector<16x1xf32>
    %170 = vector.broadcast %169 : vector<16x1xf32> to vector<16x128xf32>
    %171 = arith.subf %167, %170 : vector<16x128xf32>
    %172 = math.exp %171 : vector<16x128xf32>
    %cst_75 = arith.constant dense<0.000000e+00> : vector<16xf32>
    %173 = vector.multi_reduction <add>, %172, %cst_75 [1] : vector<16x128xf32> to vector<16xf32>
    %174 = vector.shape_cast %173 : vector<16xf32> to vector<16x1xf32>
    %175 = math.log %174 : vector<16x1xf32>
    %176 = vector.broadcast %175 : vector<16x1xf32> to vector<16x128xf32>
    %177 = arith.subf %171, %176 : vector<16x128xf32>
    %c0_76 = arith.constant 0 : index
    %c0_77 = arith.constant 0 : index
    %178 = vector.load %arg7[%c0_76, %c0_77] : memref<16x128xf32, #tpu.memory_space<vmem>>, vector<16x128xf32>
    tpu.vector_store %arg7[%c0_76, %c0_77], %177 {strides = array<i32>} : memref<16x128xf32, #tpu.memory_space<vmem>>, vector<16x128xf32>,
    return
  }
}

</mosaic_0001>

<llo_original>
// kernel: gatnet_forward.1
$region0: #{gatnet_forward.1}
  #allocation0 [shape = 'u32[]', space=smem, size = 0x4, offset = 0x4, fixed_abs, tag = 'smem constant byte address 0x4 - core index']
  #allocation1 [shape = 'u32[144,128]{1,0:T(1,128)}', space=vmem, size = 0x12000, scoped, tag = 'internal scratch']
  %s0 = inlined_call_operand.vmem [shape: f32[16,128], index: 0, kind: input, shape index: {}]
  %s1 = inlined_call_operand.vmem [shape: bf16[16,16], index: 1, kind: input, shape index: {}]
  %s2 = inlined_call_operand.vmem [shape: f32[1,128], index: 2, kind: input, shape index: {}]
  %s3 = inlined_call_operand.hbm [shape: bf16[3,128,256], index: 3, kind: input, shape index: {}]
  %s4 = inlined_call_operand.vmem [shape: f32[3,1,128], index: 4, kind: input, shape index: {}]
  %s5 = inlined_call_operand.vmem [shape: f32[3,1,128], index: 5, kind: input, shape index: {}]
  %s6 = inlined_call_operand.vmem [shape: f32[3,1,128], index: 6, kind: input, shape index: {}]
  %s7 = inlined_call_operand.vmem [shape: f32[16,128], index: 7, kind: output, shape index: {}]
  %s8 = sld [smem:[#allocation0]]
  $region42: #{gatnet_forward.1} parent=0
    _
  %s10 = ssub.s32 1, %s8
  %s11 = scalar_select 0, %s10, %s8
  $region1: #{gatnet_forward.1} parent=0
    #allocation2 [shape = 'u8[196608]{0}', space=vmem, size = 0x30000, scoped, tag = 'input window, operand 3, single buffered']
    #allocation3 [shape = 's32[1]{0}', space=sflag, size = 0x4, scoped, tag = 'scoped memory for gatnet_forward.1']
    %12 = vsyncpa [#allocation3], 0
    // Predicated region
    $region2: #{gatnet_forward.1} parent=1 // pred_check
      _
    $region3: #{gatnet_forward.1} parent=1 // pred_check_branch
      %14 = sbr.rel (0) target = $region5
    $region4: #{gatnet_forward.1} parent=1 // pred_region
      _
    $region5: #{gatnet_forward.1} parent=1 // pred_fallthru
      _
    // Predicated region
    $region6: #{gatnet_forward.1} parent=1 // pred_check
      _
    $region7: #{gatnet_forward.1} parent=1 // pred_check_branch
      %16 = sbr.rel (0) target = $region9
    $region8: #{gatnet_forward.1} parent=1 // pred_region
      _
    $region9: #{gatnet_forward.1} parent=1 // pred_fallthru
      _
    // Predicated region
    $region10: #{gatnet_forward.1} parent=1 // pred_check
      _
    $region11: #{gatnet_forward.1} parent=1 // pred_check_branch
      %18 = sbr.rel (0) target = $region13
    $region12: #{gatnet_forward.1} parent=1 // pred_region
      _
    $region13: #{gatnet_forward.1} parent=1 // pred_fallthru
      _
    // Predicated region
    $region14: #{gatnet_forward.1} parent=1 // pred_check
      _
    $region15: #{gatnet_forward.1} parent=1 // pred_check_branch
      %20 = sbr.rel (0) target = $region17
    $region16: #{gatnet_forward.1} parent=1 // pred_region
      %s22 = ssub.s32 6144, 6144
      %23 = vsyncadd [#allocation3], %s22
      %s24 = sshll.u32 [#allocation2], 4
      %s25 = int_to_ptr.vmem [resolvable:$true] %s24
      %30 = dma.hbm_to_vmem [thread:$0]  %s3, 6144, %s25, [#allocation3], 128, 128, 8
    $region17: #{gatnet_forward.1} parent=1 // pred_fallthru
      _
    // Predicated region
    $region18: #{gatnet_forward.1} parent=1 // pred_check
      _
    $region19: #{gatnet_forward.1} parent=1 // pred_check_branch
      %32 = sbr.rel (0) target = $region21
    $region20: #{gatnet_forward.1} parent=1 // pred_region
      _
    $region21: #{gatnet_forward.1} parent=1 // pred_fallthru
      _
    // Predicated region
    $region22: #{gatnet_forward.1} parent=1 // pred_check
      _
    $region23: #{gatnet_forward.1} parent=1 // pred_check_branch
      %34 = sbr.rel (0) target = $region25
    $region24: #{gatnet_forward.1} parent=1 // pred_region
      _
    $region25: #{gatnet_forward.1} parent=1 // pred_fallthru
      _
    // Predicated region
    $region26: #{gatnet_forward.1} parent=1 // pred_check
      _
    $region27: #{gatnet_forward.1} parent=1 // pred_check_branch
      %36 = sbr.rel (0) target = $region29
    $region28: #{gatnet_forward.1} parent=1 // pred_region
      _
    $region29: #{gatnet_forward.1} parent=1 // pred_fallthru
      _
    // Predicated region
    $region30: #{gatnet_forward.1} parent=1 // pred_check
      _
    $region31: #{gatnet_forward.1} parent=1 // pred_check_branch
      %38 = sbr.rel (0) target = $region33
    $region32: #{gatnet_forward.1} parent=1 // pred_region
      %39 = dma.done [#allocation3], 6144
    $region33: #{gatnet_forward.1} parent=1 // pred_fallthru
      _
    %v41 = vld [vmem:[%s0] sm:$0xff]
    %v42 = vld [vmem:[%s0 + $0x8] sm:$0xff]
    %v43 = vld [vmem:[%s1] sm:$0xf]
    %v44 = vld [vmem:[%s1 + $0x4] sm:$0xf]
    %v45 = vunpack.c.l.bf16 %v43
    %v46 = vunpack.c.l.bf16 %v44
    %v47 = vpack.c.bf16 %v42, %v41
    %v48 = vld [vmem:[#allocation2] sm:$0xff]
    %v49 = vld [vmem:[#allocation2 + $0x8] sm:$0xff]
    %v50 = vld [vmem:[#allocation2 + $0x10] sm:$0xff]
    %v51 = vld [vmem:[#allocation2 + $0x18] sm:$0xff]
    %v52 = vld [vmem:[#allocation2 + $0x20] sm:$0xff]
    %v53 = vld [vmem:[#allocation2 + $0x28] sm:$0xff]
    %v54 = vld [vmem:[#allocation2 + $0x30] sm:$0xff]
    %v55 = vld [vmem:[#allocation2 + $0x38] sm:$0xff]
    %v56 = vld [vmem:[#allocation2 + $0x40] sm:$0xff]
    %v57 = vld [vmem:[#allocation2 + $0x48] sm:$0xff]
    %v58 = vld [vmem:[#allocation2 + $0x50] sm:$0xff]
    %v59 = vld [vmem:[#allocation2 + $0x58] sm:$0xff]
    %v60 = vld [vmem:[#allocation2 + $0x60] sm:$0xff]
    %v61 = vld [vmem:[#allocation2 + $0x68] sm:$0xff]
    %v62 = vld [vmem:[#allocation2 + $0x70] sm:$0xff]
    %v63 = vld [vmem:[#allocation2 + $0x78] sm:$0xff]
    %v80 = vunpack.c.l.b16 %v48
    %v81 = vunpack.c.h.b16 %v48
    %v82 = vunpack.c.l.b16 %v49
    %v83 = vunpack.c.h.b16 %v49
    %v84 = vunpack.c.l.b16 %v50
    %v85 = vunpack.c.h.b16 %v50
    %v86 = vunpack.c.l.b16 %v51
    %v87 = vunpack.c.h.b16 %v51
    %v88 = vunpack.c.l.b16 %v52
    %v89 = vunpack.c.h.b16 %v52
    %v90 = vunpack.c.l.b16 %v53
    %v91 = vunpack.c.h.b16 %v53
    %v92 = vunpack.c.l.b16 %v54
    %v93 = vunpack.c.h.b16 %v54
    %v94 = vunpack.c.l.b16 %v55
    %v95 = vunpack.c.h.b16 %v55
    %v96 = vunpack.c.l.b16 %v56
    %v97 = vunpack.c.h.b16 %v56
    %v98 = vunpack.c.l.b16 %v57
    %v99 = vunpack.c.h.b16 %v57
    %v100 = vunpack.c.l.b16 %v58
    %v101 = vunpack.c.h.b16 %v58
    %v102 = vunpack.c.l.b16 %v59
    %v103 = vunpack.c.h.b16 %v59
    %v104 = vunpack.c.l.b16 %v60
    %v105 = vunpack.c.h.b16 %v60
    %v106 = vunpack.c.l.b16 %v61
    %v107 = vunpack.c.h.b16 %v61
    %v108 = vunpack.c.l.b16 %v62
    %v109 = vunpack.c.h.b16 %v62
    %v110 = vunpack.c.l.b16 %v63
    %v111 = vunpack.c.h.b16 %v63
    %v112 = vpack.c.b16 %v82, %v80
    %v113 = vpack.c.b16 %v83, %v81
    %v114 = vpack.c.b16 %v86, %v84
    %v115 = vpack.c.b16 %v87, %v85
    %v116 = vpack.c.b16 %v90, %v88
    %v117 = vpack.c.b16 %v91, %v89
    %v118 = vpack.c.b16 %v94, %v92
    %v119 = vpack.c.b16 %v95, %v93
    %v120 = vpack.c.b16 %v98, %v96
    %v121 = vpack.c.b16 %v99, %v97
    %v122 = vpack.c.b16 %v102, %v100
    %v123 = vpack.c.b16 %v103, %v101
    %v124 = vpack.c.b16 %v106, %v104
    %v125 = vpack.c.b16 %v107, %v105
    %v126 = vpack.c.b16 %v110, %v108
    %v127 = vpack.c.b16 %v111, %v109
    %144 = vmatprep.subr.bf16.mxu0 %v113
    %145 = vmatpush1.bf16.msra.mxu0 %v112
    %146 = vmatprep.subr.bf16.mxu0 %v115
    %147 = vmatpush1.bf16.msra.mxu0 %v114
    %148 = vmatprep.subr.bf16.mxu0 %v117
    %149 = vmatpush1.bf16.msra.mxu0 %v116
    %150 = vmatprep.subr.bf16.mxu0 %v119
    %151 = vmatpush1.bf16.msra.mxu0 %v118
    %152 = vmatprep.subr.bf16.mxu0 %v121
    %153 = vmatpush1.bf16.msra.mxu0 %v120
    %154 = vmatprep.subr.bf16.mxu0 %v123
    %155 = vmatpush1.bf16.msra.mxu0 %v122
    %156 = vmatprep.subr.bf16.mxu0 %v125
    %157 = vmatpush1.bf16.msra.mxu0 %v124
    %158 = vmatprep.subr.bf16.mxu0 %v127
    %159 = vmatpush1.bf16.msra.mxu0 %v126
    %160 = vmatprep.subr.bf16.mxu0 0
    %161 = vmatpush1.bf16.msra.mxu0 0
    %162 = vmatprep.subr.bf16.mxu0 0
    %163 = vmatpush1.bf16.msra.mxu0 0
    %164 = vmatprep.subr.bf16.mxu0 0
    %165 = vmatpush1.bf16.msra.mxu0 0
    %166 = vmatprep.subr.bf16.mxu0 0
    %167 = vmatpush1.bf16.msra.mxu0 0
    %168 = vmatprep.subr.bf16.mxu0 0
    %169 = vmatpush1.bf16.msra.mxu0 0
    %170 = vmatprep.subr.bf16.mxu0 0
    %171 = vmatpush1.bf16.msra.mxu0 0
    %172 = vmatprep.subr.bf16.mxu0 0
    %173 = vmatpush1.bf16.msra.mxu0 0
    %174 = vmatprep.subr.bf16.mxu0 0
    %175 = vmatpush1.bf16.msra.mxu0 0
    %176 = vmatprep.mubr.bf16.mxu0 0
    %177 = vmatmul.mubr.bf16.gmra.mrb[0].mxu0 %v47
    %v178 = vpop.f32.mrb[0].mxu0
    %v179 = vadd.f32 0.0, %v178
    %v180 = vpop.f32.mrb[0].mxu0
    %v181 = vadd.f32 0.0, %v180
    %v182 = vpop.f32.mrb[0].mxu0
    %v183 = vadd.f32 0.0, %v182
    %v184 = vpop.f32.mrb[0].mxu0
    %v185 = vadd.f32 0.0, %v184
    %186 = vdwg.mxu0
    %v187 = vmax.f32 %v179, -0.99
    %v188 = vmax.f32 %v183, -0.99
    %v189 = vmin.f32 %v187, 0.99
    %v190 = vmin.f32 %v188, 0.99
    %v191 = vadd.f32 %v189, 1.0
    %v192 = vadd.f32 %v190, 1.0
    %v193 = vsub.f32 1.0, %v189
    %v194 = vsub.f32 1.0, %v190
    %v195 = vrcp.pop %v193
    %v196 = vrcp.pop %v194
    %v197 = vmul.f32 %v191, %v195
    %v198 = vmul.f32 %v192, %v196
    %v199 = vlog2.pop %v197
    %v200 = vmul.f32 %v199, 0.6931472
    %v201 = vlog2.pop %v198
    %v202 = vmul.f32 %v201, 0.6931472
    %v203 = vmul.f32 %v200, 0.5
    %v204 = vmul.f32 %v202, 0.5
    %v205 = vld [vmem:[%s4] sm:$0x1]
    %v207 = vlaneseq
    %v208 = vshrl.u32 %v207, 7
    %v209 = vsub.s32 0, %v208
    %v210 = vrot.slane %v205, %v209
    %v212 = vmul.f32 %v181, %v210
    %v213 = vmul.f32 %v185, %v210
    %214 = vadd.xlane.f32.xlu0 %v212
    %v215 = vpop.xlane.xlu0 %214
    %216 = vadd.xlane.f32.xlu0 %v213
    %v217 = vpop.xlane.xlu0 %216
    %v218 = vld [vmem:[%s5] sm:$0x1]
    %219 = vmatprep.subr.mxu0 0.0
    %220 = vmatpush1.xpose.msra.mxu0 %v181
    %221 = vmatprep.subr.mxu0 0.0
    %222 = vmatpush1.xpose.msra.mxu0 %v185
    %223 = vmatprep.subr.mxu0 0.0
    %224 = vmatpush1.xpose.msra.mxu0 0.0
    %225 = vmatprep.subr.mxu0 0.0
    %226 = vmatpush1.xpose.msra.mxu0 0.0
    %227 = vmatprep.subr.mxu0 0.0
    %228 = vmatpush1.xpose.msra.mxu0 0.0
    %229 = vmatprep.subr.mxu0 0.0
    %230 = vmatpush1.xpose.msra.mxu0 0.0
    %231 = vmatprep.subr.mxu0 0.0
    %232 = vmatpush1.xpose.msra.mxu0 0.0
    %233 = vmatprep.subr.mxu0 0.0
    %234 = vmatpush1.xpose.msra.mxu0 0.0
    %235 = vmatprep.subr.mxu0 0.0
    %236 = vmatpush1.xpose.msra.mxu0 0.0
    %237 = vmatprep.subr.mxu0 0.0
    %238 = vmatpush1.xpose.msra.mxu0 0.0
    %239 = vmatprep.subr.mxu0 0.0
    %240 = vmatpush1.xpose.msra.mxu0 0.0
    %241 = vmatprep.subr.mxu0 0.0
    %242 = vmatpush1.xpose.msra.mxu0 0.0
    %243 = vmatprep.subr.mxu0 0.0
    %244 = vmatpush1.xpose.msra.mxu0 0.0
    %245 = vmatprep.subr.mxu0 0.0
    %246 = vmatpush1.xpose.msra.mxu0 0.0
    %247 = vmatprep.subr.mxu0 0.0
    %248 = vmatpush1.xpose.msra.mxu0 0.0
    %249 = vmatprep.subr.mxu0 0.0
    %250 = vmatpush1.xpose.msra.mxu0 0.0
    %251 = vmatprep.subr.mxu0 0.0
    %252 = vmatpush1.xpose.msra.mxu0 0.0
    %253 = vmatprep.subr.mxu0 0.0
    %254 = vmatpush1.xpose.msra.mxu0 0.0
    %255 = vmatprep.subr.mxu0 0.0
    %256 = vmatpush1.xpose.msra.mxu0 0.0
    %257 = vmatprep.subr.mxu0 0.0
    %258 = vmatpush1.xpose.msra.mxu0 0.0
    %259 = vmatprep.subr.mxu0 0.0
    %260 = vmatpush1.xpose.msra.mxu0 0.0
    %261 = vmatprep.subr.mxu0 0.0
    %262 = vmatpush1.xpose.msra.mxu0 0.0
    %263 = vmatprep.subr.mxu0 0.0
    %264 = vmatpush1.xpose.msra.mxu0 0.0
    %265 = vmatprep.subr.mxu0 0.0
    %266 = vmatpush1.xpose.msra.mxu0 0.0
    %267 = vmatprep.subr.mxu0 0.0
    %268 = vmatpush1.xpose.msra.mxu0 0.0
    %269 = vmatprep.subr.mxu0 0.0
    %270 = vmatpush1.xpose.msra.mxu0 0.0
    %271 = vmatprep.subr.mxu0 0.0
    %272 = vmatpush1.xpose.msra.mxu0 0.0
    %273 = vmatprep.subr.mxu0 0.0
    %274 = vmatpush1.xpose.msra.mxu0 0.0
    %275 = vmatprep.subr.mxu0 0.0
    %276 = vmatpush1.xpose.msra.mxu0 0.0
    %277 = vmatprep.subr.mxu0 0.0
    %278 = vmatpush1.xpose.msra.mxu0 0.0
    %279 = vmatprep.subr.mxu0 0.0
    %280 = vmatpush1.xpose.msra.mxu0 0.0
    %281 = vmatprep.subr.mxu0 0.0
    %282 = vmatpush1.xpose.msra.mxu0 0.0
    %283 = vmatprep.mubr.f32.mxu0 0.0
    %284 = vmatmul.mubr.f32.gmra.mrb[0].mxu0 %v218
    %v285 = vpop.f32.mrb[0].mxu0
    %v286 = vadd.f32 0.0, %v285
    %v287 = vpop.f32.mrb[0].mxu0
    %288 = vdwg.mxu0
    %v289 = vlaneseq
    %v290 = vshrl.u32 %v289, 7
    %v291 = vsub.s32 0, %v290
    %v292 = vrot.slane %v286, %v291
    %v293 = vadd.f32 %v215, %v292
    %v294 = vadd.f32 %v217, %v292
    %v295 = vmul.f32 %v293, 0.2
    %v296 = vmul.f32 %v294, 0.2
    %v297 = vmax.f32 %v293, %v295
    %v298 = vmax.f32 %v294, %v296
    %v299 = vadd.f32 %v297, %v45
    %v300 = vadd.f32 %v298, %v46
    %vm301 = vcmask 130048
    %v302 = vsel %vm301, %v299, -inf
    %303 = vmax.xlane.f32.xlu0 %v302
    %v304 = vpop.xlane.xlu0 %303
    %v305 = vsel %vm301, %v300, -inf
    %306 = vmax.xlane.f32.xlu0 %v305
    %v307 = vpop.xlane.xlu0 %306
    %v308 = vsub.f32 %v299, %v304
    %v309 = vsub.f32 %v300, %v307
    %v310 = vmul.f32 %v308, 1.442695
    %v311 = vpow.pop %v310
    %v312 = vmul.f32 %v309, 1.442695
    %v313 = vpow.pop %v312
    %v314 = vsel %vm301, %v311, 0.0
    %315 = vadd.xlane.f32.xlu0 %v314
    %v316 = vpop.xlane.xlu0 %315
    %v317 = vsel %vm301, %v313, 0.0
    %318 = vadd.xlane.f32.xlu0 %v317
    %v319 = vpop.xlane.xlu0 %318
    %v320 = vrcp.pop %v316
    %v321 = vrcp.pop %v319
    %v322 = vmul.f32 %v311, %v320
    %v323 = vmul.f32 %v313, %v321
    %v324 = vpack.c.bf16 %v323, %v322
    %v325 = vpack.c.bf16 %v185, %v181
    %v326 = vld [vmem:[%s6] sm:$0x1]
    %v328 = vlaneseq
    %v329 = vshrl.u32 %v328, 7
    %v330 = vsub.s32 0, %v329
    %v331 = vrot.slane %v326, %v330
    %v334 = vsel %vm301, %v324, 0
    %336 = vmatprep.subr.bf16.mxu0 0
    %337 = vmatpush1.bf16.msra.mxu0 %v325
    %338 = vmatprep.subr.bf16.mxu0 0
    %339 = vmatpush1.bf16.msra.mxu0 0
    %340 = vmatprep.subr.bf16.mxu0 0
    %341 = vmatpush1.bf16.msra.mxu0 0
    %342 = vmatprep.subr.bf16.mxu0 0
    %343 = vmatpush1.bf16.msra.mxu0 0
    %344 = vmatprep.subr.bf16.mxu0 0
    %345 = vmatpush1.bf16.msra.mxu0 0
    %346 = vmatprep.subr.bf16.mxu0 0
    %347 = vmatpush1.bf16.msra.mxu0 0
    %348 = vmatprep.subr.bf16.mxu0 0
    %349 = vmatpush1.bf16.msra.mxu0 0
    %350 = vmatprep.subr.bf16.mxu0 0
    %351 = vmatpush1.bf16.msra.mxu0 0
    %352 = vmatprep.subr.bf16.mxu0 0
    %353 = vmatpush1.bf16.msra.mxu0 0
    %354 = vmatprep.subr.bf16.mxu0 0
    %355 = vmatpush1.bf16.msra.mxu0 0
    %356 = vmatprep.subr.bf16.mxu0 0
    %357 = vmatpush1.bf16.msra.mxu0 0
    %358 = vmatprep.subr.bf16.mxu0 0
    %359 = vmatpush1.bf16.msra.mxu0 0
    %360 = vmatprep.subr.bf16.mxu0 0
    %361 = vmatpush1.bf16.msra.mxu0 0
    %362 = vmatprep.subr.bf16.mxu0 0
    %363 = vmatpush1.bf16.msra.mxu0 0
    %364 = vmatprep.subr.bf16.mxu0 0
    %365 = vmatpush1.bf16.msra.mxu0 0
    %366 = vmatprep.subr.bf16.mxu0 0
    %367 = vmatpush1.bf16.msra.mxu0 0
    %368 = vmatprep.mubr.bf16.mxu0 0
    %369 = vmatmul.mubr.bf16.gmra.mrb[0].mxu0 %v334
    %v370 = vpop.f32.mrb[0].mxu0
    %v371 = vadd.f32 %v331, %v370
    %v372 = vpop.f32.mrb[0].mxu0
    %v373 = vpop.f32.mrb[0].mxu0
    %v374 = vadd.f32 %v331, %v373
    %v375 = vpop.f32.mrb[0].mxu0
    %376 = vdwg.mxu0
    %v377 = vadd.f32 %v203, %v371
    %v378 = vadd.f32 %v204, %v374
    %v379 = vtanh.pop %v377
    %v380 = vtanh.pop %v378
    %v381 = vpack.c.bf16 %v380, %v379
    %s382 = scalar_lea.vmem [#allocation2], 128
    %v383 = vld [vmem:[%s382] sm:$0xff]
    %v384 = vld [vmem:[%s382 + $0x8] sm:$0xff]
    %v385 = vld [vmem:[%s382 + $0x10] sm:$0xff]
    %v386 = vld [vmem:[%s382 + $0x18] sm:$0xff]
    %v387 = vld [vmem:[%s382 + $0x20] sm:$0xff]
    %v388 = vld [vmem:[%s382 + $0x28] sm:$0xff]
    %v389 = vld [vmem:[%s382 + $0x30] sm:$0xff]
    %v390 = vld [vmem:[%s382 + $0x38] sm:$0xff]
    %v391 = vld [vmem:[%s382 + $0x40] sm:$0xff]
    %v392 = vld [vmem:[%s382 + $0x48] sm:$0xff]
    %v393 = vld [vmem:[%s382 + $0x50] sm:$0xff]
    %v394 = vld [vmem:[%s382 + $0x58] sm:$0xff]
    %v395 = vld [vmem:[%s382 + $0x60] sm:$0xff]
    %v396 = vld [vmem:[%s382 + $0x68] sm:$0xff]
    %v397 = vld [vmem:[%s382 + $0x70] sm:$0xff]
    %v398 = vld [vmem:[%s382 + $0x78] sm:$0xff]
    %v415 = vunpack.c.l.b16 %v383
    %v416 = vunpack.c.h.b16 %v383
    %v417 = vunpack.c.l.b16 %v384
    %v418 = vunpack.c.h.b16 %v384
    %v419 = vunpack.c.l.b16 %v385
    %v420 = vunpack.c.h.b16 %v385
    %v421 = vunpack.c.l.b16 %v386
    %v422 = vunpack.c.h.b16 %v386
    %v423 = vunpack.c.l.b16 %v387
    %v424 = vunpack.c.h.b16 %v387
    %v425 = vunpack.c.l.b16 %v388
    %v426 = vunpack.c.h.b16 %v388
    %v427 = vunpack.c.l.b16 %v389
    %v428 = vunpack.c.h.b16 %v389
    %v429 = vunpack.c.l.b16 %v390
    %v430 = vunpack.c.h.b16 %v390
    %v431 = vunpack.c.l.b16 %v391
    %v432 = vunpack.c.h.b16 %v391
    %v433 = vunpack.c.l.b16 %v392
    %v434 = vunpack.c.h.b16 %v392
    %v435 = vunpack.c.l.b16 %v393
    %v436 = vunpack.c.h.b16 %v393
    %v437 = vunpack.c.l.b16 %v394
    %v438 = vunpack.c.h.b16 %v394
    %v439 = vunpack.c.l.b16 %v395
    %v440 = vunpack.c.h.b16 %v395
    %v441 = vunpack.c.l.b16 %v396
    %v442 = vunpack.c.h.b16 %v396
    %v443 = vunpack.c.l.b16 %v397
    %v444 = vunpack.c.h.b16 %v397
    %v445 = vunpack.c.l.b16 %v398
    %v446 = vunpack.c.h.b16 %v398
    %v447 = vpack.c.b16 %v417, %v415
    %v448 = vpack.c.b16 %v418, %v416
    %v449 = vpack.c.b16 %v421, %v419
    %v450 = vpack.c.b16 %v422, %v420
    %v451 = vpack.c.b16 %v425, %v423
    %v452 = vpack.c.b16 %v426, %v424
    %v453 = vpack.c.b16 %v429, %v427
    %v454 = vpack.c.b16 %v430, %v428
    %v455 = vpack.c.b16 %v433, %v431
    %v456 = vpack.c.b16 %v434, %v432
    %v457 = vpack.c.b16 %v437, %v435
    %v458 = vpack.c.b16 %v438, %v436
    %v459 = vpack.c.b16 %v441, %v439
    %v460 = vpack.c.b16 %v442, %v440
    %v461 = vpack.c.b16 %v445, %v443
    %v462 = vpack.c.b16 %v446, %v444
    %479 = vmatprep.subr.bf16.mxu0 %v448
    %480 = vmatpush1.bf16.msra.mxu0 %v447
    %481 = vmatprep.subr.bf16.mxu0 %v450
    %482 = vmatpush1.bf16.msra.mxu0 %v449
    %483 = vmatprep.subr.bf16.mxu0 %v452
    %484 = vmatpush1.bf16.msra.mxu0 %v451
    %485 = vmatprep.subr.bf16.mxu0 %v454
    %486 = vmatpush1.bf16.msra.mxu0 %v453
    %487 = vmatprep.subr.bf16.mxu0 %v456
    %488 = vmatpush1.bf16.msra.mxu0 %v455
    %489 = vmatprep.subr.bf16.mxu0 %v458
    %490 = vmatpush1.bf16.msra.mxu0 %v457
    %491 = vmatprep.subr.bf16.mxu0 %v460
    %492 = vmatpush1.bf16.msra.mxu0 %v459
    %493 = vmatprep.subr.bf16.mxu0 %v462
    %494 = vmatpush1.bf16.msra.mxu0 %v461
    %495 = vmatprep.subr.bf16.mxu0 0
    %496 = vmatpush1.bf16.msra.mxu0 0
    %497 = vmatprep.subr.bf16.mxu0 0
    %498 = vmatpush1.bf16.msra.mxu0 0
    %499 = vmatprep.subr.bf16.mxu0 0
    %500 = vmatpush1.bf16.msra.mxu0 0
    %501 = vmatprep.subr.bf16.mxu0 0
    %502 = vmatpush1.bf16.msra.mxu0 0
    %503 = vmatprep.subr.bf16.mxu0 0
    %504 = vmatpush1.bf16.msra.mxu0 0
    %505 = vmatprep.subr.bf16.mxu0 0
    %506 = vmatpush1.bf16.msra.mxu0 0
    %507 = vmatprep.subr.bf16.mxu0 0
    %508 = vmatpush1.bf16.msra.mxu0 0
    %509 = vmatprep.subr.bf16.mxu0 0
    %510 = vmatpush1.bf16.msra.mxu0 0
    %511 = vmatprep.mubr.bf16.mxu0 0
    %512 = vmatmul.mubr.bf16.gmra.mrb[0].mxu0 %v381
    %v513 = vpop.f32.mrb[0].mxu0
    %v514 = vadd.f32 0.0, %v513
    %v515 = vpop.f32.mrb[0].mxu0
    %v516 = vadd.f32 0.0, %v515
    %v517 = vpop.f32.mrb[0].mxu0
    %v518 = vadd.f32 0.0, %v517
    %v519 = vpop.f32.mrb[0].mxu0
    %v520 = vadd.f32 0.0, %v519
    %521 = vdwg.mxu0
    %v522 = vmax.f32 %v514, -0.99
    %v523 = vmax.f32 %v518, -0.99
    %v524 = vmin.f32 %v522, 0.99
    %v525 = vmin.f32 %v523, 0.99
    %v526 = vadd.f32 %v524, 1.0
    %v527 = vadd.f32 %v525, 1.0
    %v528 = vsub.f32 1.0, %v524
    %v529 = vsub.f32 1.0, %v525
    %v530 = vrcp.pop %v528
    %v531 = vrcp.pop %v529
    %v532 = vmul.f32 %v526, %v530
    %v533 = vmul.f32 %v527, %v531
    %v534 = vlog2.pop %v532
    %v535 = vmul.f32 %v534, 0.6931472
    %v536 = vlog2.pop %v533
    %v537 = vmul.f32 %v536, 0.6931472
    %v538 = vmul.f32 %v535, 0.5
    %v539 = vmul.f32 %v537, 0.5
    %s540 = scalar_lea.vmem %s4, 1
    %v541 = vld [vmem:[%s540] sm:$0x1]
    %v543 = vlaneseq
    %v544 = vshrl.u32 %v543, 7
    %v545 = vsub.s32 0, %v544
    %v546 = vrot.slane %v541, %v545
    %v548 = vmul.f32 %v516, %v546
    %v549 = vmul.f32 %v520, %v546
    %550 = vadd.xlane.f32.xlu0 %v548
    %v551 = vpop.xlane.xlu0 %550
    %552 = vadd.xlane.f32.xlu0 %v549
    %v553 = vpop.xlane.xlu0 %552
    %s554 = scalar_lea.vmem %s5, 1
    %v555 = vld [vmem:[%s554] sm:$0x1]
    %556 = vmatprep.subr.mxu0 0.0
    %557 = vmatpush1.xpose.msra.mxu0 %v516
    %558 = vmatprep.subr.mxu0 0.0
    %559 = vmatpush1.xpose.msra.mxu0 %v520
    %560 = vmatprep.subr.mxu0 0.0
    %561 = vmatpush1.xpose.msra.mxu0 0.0
    %562 = vmatprep.subr.mxu0 0.0
    %563 = vmatpush1.xpose.msra.mxu0 0.0
    %564 = vmatprep.subr.mxu0 0.0
    %565 = vmatpush1.xpose.msra.mxu0 0.0
    %566 = vmatprep.subr.mxu0 0.0
    %567 = vmatpush1.xpose.msra.mxu0 0.0
    %568 = vmatprep.subr.mxu0 0.0
    %569 = vmatpush1.xpose.msra.mxu0 0.0
    %570 = vmatprep.subr.mxu0 0.0
    %571 = vmatpush1.xpose.msra.mxu0 0.0
    %572 = vmatprep.subr.mxu0 0.0
    %573 = vmatpush1.xpose.msra.mxu0 0.0
    %574 = vmatprep.subr.mxu0 0.0
    %575 = vmatpush1.xpose.msra.mxu0 0.0
    %576 = vmatprep.subr.mxu0 0.0
    %577 = vmatpush1.xpose.msra.mxu0 0.0
    %578 = vmatprep.subr.mxu0 0.0
    %579 = vmatpush1.xpose.msra.mxu0 0.0
    %580 = vmatprep.subr.mxu0 0.0
    %581 = vmatpush1.xpose.msra.mxu0 0.0
    %582 = vmatprep.subr.mxu0 0.0
    %583 = vmatpush1.xpose.msra.mxu0 0.0
    %584 = vmatprep.subr.mxu0 0.0
    %585 = vmatpush1.xpose.msra.mxu0 0.0
    %586 = vmatprep.subr.mxu0 0.0
    %587 = vmatpush1.xpose.msra.mxu0 0.0
    %588 = vmatprep.subr.mxu0 0.0
    %589 = vmatpush1.xpose.msra.mxu0 0.0
    %590 = vmatprep.subr.mxu0 0.0
    %591 = vmatpush1.xpose.msra.mxu0 0.0
    %592 = vmatprep.subr.mxu0 0.0
    %593 = vmatpush1.xpose.msra.mxu0 0.0
    %594 = vmatprep.subr.mxu0 0.0
    %595 = vmatpush1.xpose.msra.mxu0 0.0
    %596 = vmatprep.subr.mxu0 0.0
    %597 = vmatpush1.xpose.msra.mxu0 0.0
    %598 = vmatprep.subr.mxu0 0.0
    %599 = vmatpush1.xpose.msra.mxu0 0.0
    %600 = vmatprep.subr.mxu0 0.0
    %601 = vmatpush1.xpose.msra.mxu0 0.0
    %602 = vmatprep.subr.mxu0 0.0
    %603 = vmatpush1.xpose.msra.mxu0 0.0
    %604 = vmatprep.subr.mxu0 0.0
    %605 = vmatpush1.xpose.msra.mxu0 0.0
    %606 = vmatprep.subr.mxu0 0.0
    %607 = vmatpush1.xpose.msra.mxu0 0.0
    %608 = vmatprep.subr.mxu0 0.0
    %609 = vmatpush1.xpose.msra.mxu0 0.0
    %610 = vmatprep.subr.mxu0 0.0
    %611 = vmatpush1.xpose.msra.mxu0 0.0
    %612 = vmatprep.subr.mxu0 0.0
    %613 = vmatpush1.xpose.msra.mxu0 0.0
    %614 = vmatprep.subr.mxu0 0.0
    %615 = vmatpush1.xpose.msra.mxu0 0.0
    %616 = vmatprep.subr.mxu0 0.0
    %617 = vmatpush1.xpose.msra.mxu0 0.0
    %618 = vmatprep.subr.mxu0 0.0
    %619 = vmatpush1.xpose.msra.mxu0 0.0
    %620 = vmatprep.mubr.f32.mxu0 0.0
    %621 = vmatmul.mubr.f32.gmra.mrb[0].mxu0 %v555
    %v622 = vpop.f32.mrb[0].mxu0
    %v623 = vadd.f32 0.0, %v622
    %v624 = vpop.f32.mrb[0].mxu0
    %625 = vdwg.mxu0
    %v626 = vlaneseq
    %v627 = vshrl.u32 %v626, 7
    %v628 = vsub.s32 0, %v627
    %v629 = vrot.slane %v623, %v628
    %v630 = vadd.f32 %v551, %v629
    %v631 = vadd.f32 %v553, %v629
    %v632 = vmul.f32 %v630, 0.2
    %v633 = vmul.f32 %v631, 0.2
    %v634 = vmax.f32 %v630, %v632
    %v635 = vmax.f32 %v631, %v633
    %v636 = vadd.f32 %v634, %v45
    %v637 = vadd.f32 %v635, %v46
    %v638 = vsel %vm301, %v636, -inf
    %639 = vmax.xlane.f32.xlu0 %v638
    %v640 = vpop.xlane.xlu0 %639
    %v641 = vsel %vm301, %v637, -inf
    %642 = vmax.xlane.f32.xlu0 %v641
    %v643 = vpop.xlane.xlu0 %642
    %v644 = vsub.f32 %v636, %v640
    %v645 = vsub.f32 %v637, %v643
    %v646 = vmul.f32 %v644, 1.442695
    %v647 = vpow.pop %v646
    %v648 = vmul.f32 %v645, 1.442695
    %v649 = vpow.pop %v648
    %v650 = vsel %vm301, %v647, 0.0
    %651 = vadd.xlane.f32.xlu0 %v650
    %v652 = vpop.xlane.xlu0 %651
    %v653 = vsel %vm301, %v649, 0.0
    %654 = vadd.xlane.f32.xlu0 %v653
    %v655 = vpop.xlane.xlu0 %654
    %v656 = vrcp.pop %v652
    %v657 = vrcp.pop %v655
    %v658 = vmul.f32 %v647, %v656
    %v659 = vmul.f32 %v649, %v657
    %v660 = vpack.c.bf16 %v659, %v658
    %v661 = vpack.c.bf16 %v520, %v516
    %s662 = scalar_lea.vmem %s6, 1
    %v663 = vld [vmem:[%s662] sm:$0x1]
    %v665 = vlaneseq
    %v666 = vshrl.u32 %v665, 7
    %v667 = vsub.s32 0, %v666
    %v668 = vrot.slane %v663, %v667
    %v671 = vsel %vm301, %v660, 0
    %673 = vmatprep.subr.bf16.mxu0 0
    %674 = vmatpush1.bf16.msra.mxu0 %v661
    %675 = vmatprep.subr.bf16.mxu0 0
    %676 = vmatpush1.bf16.msra.mxu0 0
    %677 = vmatprep.subr.bf16.mxu0 0
    %678 = vmatpush1.bf16.msra.mxu0 0
    %679 = vmatprep.subr.bf16.mxu0 0
    %680 = vmatpush1.bf16.msra.mxu0 0
    %681 = vmatprep.subr.bf16.mxu0 0
    %682 = vmatpush1.bf16.msra.mxu0 0
    %683 = vmatprep.subr.bf16.mxu0 0
    %684 = vmatpush1.bf16.msra.mxu0 0
    %685 = vmatprep.subr.bf16.mxu0 0
    %686 = vmatpush1.bf16.msra.mxu0 0
    %687 = vmatprep.subr.bf16.mxu0 0
    %688 = vmatpush1.bf16.msra.mxu0 0
    %689 = vmatprep.subr.bf16.mxu0 0
    %690 = vmatpush1.bf16.msra.mxu0 0
    %691 = vmatprep.subr.bf16.mxu0 0
    %692 = vmatpush1.bf16.msra.mxu0 0
    %693 = vmatprep.subr.bf16.mxu0 0
    %694 = vmatpush1.bf16.msra.mxu0 0
    %695 = vmatprep.subr.bf16.mxu0 0
    %696 = vmatpush1.bf16.msra.mxu0 0
    %697 = vmatprep.subr.bf16.mxu0 0
    %698 = vmatpush1.bf16.msra.mxu0 0
    %699 = vmatprep.subr.bf16.mxu0 0
    %700 = vmatpush1.bf16.msra.mxu0 0
    %701 = vmatprep.subr.bf16.mxu0 0
    %702 = vmatpush1.bf16.msra.mxu0 0
    %703 = vmatprep.subr.bf16.mxu0 0
    %704 = vmatpush1.bf16.msra.mxu0 0
    %705 = vmatprep.mubr.bf16.mxu0 0
    %706 = vmatmul.mubr.bf16.gmra.mrb[0].mxu0 %v671
    %v707 = vpop.f32.mrb[0].mxu0
    %v708 = vadd.f32 %v668, %v707
    %v709 = vpop.f32.mrb[0].mxu0
    %v710 = vpop.f32.mrb[0].mxu0
    %v711 = vadd.f32 %v668, %v710
    %v712 = vpop.f32.mrb[0].mxu0
    %713 = vdwg.mxu0
    %v714 = vadd.f32 %v538, %v708
    %v715 = vadd.f32 %v539, %v711
    %v716 = vtanh.pop %v714
    %v717 = vtanh.pop %v715
    %v718 = vpack.c.bf16 %v717, %v716
    %s719 = scalar_lea.vmem [#allocation2], 256
    %v720 = vld [vmem:[%s719] sm:$0xff]
    %v721 = vld [vmem:[%s719 + $0x8] sm:$0xff]
    %v722 = vld [vmem:[%s719 + $0x10] sm:$0xff]
    %v723 = vld [vmem:[%s719 + $0x18] sm:$0xff]
    %v724 = vld [vmem:[%s719 + $0x20] sm:$0xff]
    %v725 = vld [vmem:[%s719 + $0x28] sm:$0xff]
    %v726 = vld [vmem:[%s719 + $0x30] sm:$0xff]
    %v727 = vld [vmem:[%s719 + $0x38] sm:$0xff]
    %v728 = vld [vmem:[%s719 + $0x40] sm:$0xff]
    %v729 = vld [vmem:[%s719 + $0x48] sm:$0xff]
    %v730 = vld [vmem:[%s719 + $0x50] sm:$0xff]
    %v731 = vld [vmem:[%s719 + $0x58] sm:$0xff]
    %v732 = vld [vmem:[%s719 + $0x60] sm:$0xff]
    %v733 = vld [vmem:[%s719 + $0x68] sm:$0xff]
    %v734 = vld [vmem:[%s719 + $0x70] sm:$0xff]
    %v735 = vld [vmem:[%s719 + $0x78] sm:$0xff]
    %v752 = vunpack.c.l.b16 %v720
    %v753 = vunpack.c.h.b16 %v720
    %v754 = vunpack.c.l.b16 %v721
    %v755 = vunpack.c.h.b16 %v721
    %v756 = vunpack.c.l.b16 %v722
    %v757 = vunpack.c.h.b16 %v722
    %v758 = vunpack.c.l.b16 %v723
    %v759 = vunpack.c.h.b16 %v723
    %v760 = vunpack.c.l.b16 %v724
    %v761 = vunpack.c.h.b16 %v724
    %v762 = vunpack.c.l.b16 %v725
    %v763 = vunpack.c.h.b16 %v725
    %v764 = vunpack.c.l.b16 %v726
    %v765 = vunpack.c.h.b16 %v726
    %v766 = vunpack.c.l.b16 %v727
    %v767 = vunpack.c.h.b16 %v727
    %v768 = vunpack.c.l.b16 %v728
    %v769 = vunpack.c.h.b16 %v728
    %v770 = vunpack.c.l.b16 %v729
    %v771 = vunpack.c.h.b16 %v729
    %v772 = vunpack.c.l.b16 %v730
    %v773 = vunpack.c.h.b16 %v730
    %v774 = vunpack.c.l.b16 %v731
    %v775 = vunpack.c.h.b16 %v731
    %v776 = vunpack.c.l.b16 %v732
    %v777 = vunpack.c.h.b16 %v732
    %v778 = vunpack.c.l.b16 %v733
    %v779 = vunpack.c.h.b16 %v733
    %v780 = vunpack.c.l.b16 %v734
    %v781 = vunpack.c.h.b16 %v734
    %v782 = vunpack.c.l.b16 %v735
    %v783 = vunpack.c.h.b16 %v735
    %v784 = vpack.c.b16 %v754, %v752
    %v785 = vpack.c.b16 %v755, %v753
    %v786 = vpack.c.b16 %v758, %v756
    %v787 = vpack.c.b16 %v759, %v757
    %v788 = vpack.c.b16 %v762, %v760
    %v789 = vpack.c.b16 %v763, %v761
    %v790 = vpack.c.b16 %v766, %v764
    %v791 = vpack.c.b16 %v767, %v765
    %v792 = vpack.c.b16 %v770, %v768
    %v793 = vpack.c.b16 %v771, %v769
    %v794 = vpack.c.b16 %v774, %v772
    %v795 = vpack.c.b16 %v775, %v773
    %v796 = vpack.c.b16 %v778, %v776
    %v797 = vpack.c.b16 %v779, %v777
    %v798 = vpack.c.b16 %v782, %v780
    %v799 = vpack.c.b16 %v783, %v781
    %816 = vmatprep.subr.bf16.mxu0 %v785
    %817 = vmatpush1.bf16.msra.mxu0 %v784
    %818 = vmatprep.subr.bf16.mxu0 %v787
    %819 = vmatpush1.bf16.msra.mxu0 %v786
    %820 = vmatprep.subr.bf16.mxu0 %v789
    %821 = vmatpush1.bf16.msra.mxu0 %v788
    %822 = vmatprep.subr.bf16.mxu0 %v791
    %823 = vmatpush1.bf16.msra.mxu0 %v790
    %824 = vmatprep.subr.bf16.mxu0 %v793
    %825 = vmatpush1.bf16.msra.mxu0 %v792
    %826 = vmatprep.subr.bf16.mxu0 %v795
    %827 = vmatpush1.bf16.msra.mxu0 %v794
    %828 = vmatprep.subr.bf16.mxu0 %v797
    %829 = vmatpush1.bf16.msra.mxu0 %v796
    %830 = vmatprep.subr.bf16.mxu0 %v799
    %831 = vmatpush1.bf16.msra.mxu0 %v798
    %832 = vmatprep.subr.bf16.mxu0 0
    %833 = vmatpush1.bf16.msra.mxu0 0
    %834 = vmatprep.subr.bf16.mxu0 0
    %835 = vmatpush1.bf16.msra.mxu0 0
    %836 = vmatprep.subr.bf16.mxu0 0
    %837 = vmatpush1.bf16.msra.mxu0 0
    %838 = vmatprep.subr.bf16.mxu0 0
    %839 = vmatpush1.bf16.msra.mxu0 0
    %840 = vmatprep.subr.bf16.mxu0 0
    %841 = vmatpush1.bf16.msra.mxu0 0
    %842 = vmatprep.subr.bf16.mxu0 0
    %843 = vmatpush1.bf16.msra.mxu0 0
    %844 = vmatprep.subr.bf16.mxu0 0
    %845 = vmatpush1.bf16.msra.mxu0 0
    %846 = vmatprep.subr.bf16.mxu0 0
    %847 = vmatpush1.bf16.msra.mxu0 0
    %848 = vmatprep.mubr.bf16.mxu0 0
    %849 = vmatmul.mubr.bf16.gmra.mrb[0].mxu0 %v718
    %v850 = vpop.f32.mrb[0].mxu0
    %v851 = vadd.f32 0.0, %v850
    %v852 = vpop.f32.mrb[0].mxu0
    %v853 = vadd.f32 0.0, %v852
    %v854 = vpop.f32.mrb[0].mxu0
    %v855 = vadd.f32 0.0, %v854
    %v856 = vpop.f32.mrb[0].mxu0
    %v857 = vadd.f32 0.0, %v856
    %858 = vdwg.mxu0
    %v859 = vmax.f32 %v851, -0.99
    %v860 = vmax.f32 %v855, -0.99
    %v861 = vmin.f32 %v859, 0.99
    %v862 = vmin.f32 %v860, 0.99
    %v863 = vadd.f32 %v861, 1.0
    %v864 = vadd.f32 %v862, 1.0
    %v865 = vsub.f32 1.0, %v861
    %v866 = vsub.f32 1.0, %v862
    %v867 = vrcp.pop %v865
    %v868 = vrcp.pop %v866
    %v869 = vmul.f32 %v863, %v867
    %v870 = vmul.f32 %v864, %v868
    %v871 = vlog2.pop %v869
    %v872 = vmul.f32 %v871, 0.6931472
    %v873 = vlog2.pop %v870
    %v874 = vmul.f32 %v873, 0.6931472
    %v875 = vmul.f32 %v872, 0.5
    %v876 = vmul.f32 %v874, 0.5
    %s877 = scalar_lea.vmem %s4, 2
    %v878 = vld [vmem:[%s877] sm:$0x1]
    %v880 = vlaneseq
    %v881 = vshrl.u32 %v880, 7
    %v882 = vsub.s32 0, %v881
    %v883 = vrot.slane %v878, %v882
    %v885 = vmul.f32 %v853, %v883
    %v886 = vmul.f32 %v857, %v883
    %887 = vadd.xlane.f32.xlu0 %v885
    %v888 = vpop.xlane.xlu0 %887
    %889 = vadd.xlane.f32.xlu0 %v886
    %v890 = vpop.xlane.xlu0 %889
    %s891 = scalar_lea.vmem %s5, 2
    %v892 = vld [vmem:[%s891] sm:$0x1]
    %893 = vmatprep.subr.mxu0 0.0
    %894 = vmatpush1.xpose.msra.mxu0 %v853
    %895 = vmatprep.subr.mxu0 0.0
    %896 = vmatpush1.xpose.msra.mxu0 %v857
    %897 = vmatprep.subr.mxu0 0.0
    %898 = vmatpush1.xpose.msra.mxu0 0.0
    %899 = vmatprep.subr.mxu0 0.0
    %900 = vmatpush1.xpose.msra.mxu0 0.0
    %901 = vmatprep.subr.mxu0 0.0
    %902 = vmatpush1.xpose.msra.mxu0 0.0
    %903 = vmatprep.subr.mxu0 0.0
    %904 = vmatpush1.xpose.msra.mxu0 0.0
    %905 = vmatprep.subr.mxu0 0.0
    %906 = vmatpush1.xpose.msra.mxu0 0.0
    %907 = vmatprep.subr.mxu0 0.0
    %908 = vmatpush1.xpose.msra.mxu0 0.0
    %909 = vmatprep.subr.mxu0 0.0
    %910 = vmatpush1.xpose.msra.mxu0 0.0
    %911 = vmatprep.subr.mxu0 0.0
    %912 = vmatpush1.xpose.msra.mxu0 0.0
    %913 = vmatprep.subr.mxu0 0.0
    %914 = vmatpush1.xpose.msra.mxu0 0.0
    %915 = vmatprep.subr.mxu0 0.0
    %916 = vmatpush1.xpose.msra.mxu0 0.0
    %917 = vmatprep.subr.mxu0 0.0
    %918 = vmatpush1.xpose.msra.mxu0 0.0
    %919 = vmatprep.subr.mxu0 0.0
    %920 = vmatpush1.xpose.msra.mxu0 0.0
    %921 = vmatprep.subr.mxu0 0.0
    %922 = vmatpush1.xpose.msra.mxu0 0.0
    %923 = vmatprep.subr.mxu0 0.0
    %924 = vmatpush1.xpose.msra.mxu0 0.0
    %925 = vmatprep.subr.mxu0 0.0
    %926 = vmatpush1.xpose.msra.mxu0 0.0
    %927 = vmatprep.subr.mxu0 0.0
    %928 = vmatpush1.xpose.msra.mxu0 0.0
    %929 = vmatprep.subr.mxu0 0.0
    %930 = vmatpush1.xpose.msra.mxu0 0.0
    %931 = vmatprep.subr.mxu0 0.0
    %932 = vmatpush1.xpose.msra.mxu0 0.0
    %933 = vmatprep.subr.mxu0 0.0
    %934 = vmatpush1.xpose.msra.mxu0 0.0
    %935 = vmatprep.subr.mxu0 0.0
    %936 = vmatpush1.xpose.msra.mxu0 0.0
    %937 = vmatprep.subr.mxu0 0.0
    %938 = vmatpush1.xpose.msra.mxu0 0.0
    %939 = vmatprep.subr.mxu0 0.0
    %940 = vmatpush1.xpose.msra.mxu0 0.0
    %941 = vmatprep.subr.mxu0 0.0
    %942 = vmatpush1.xpose.msra.mxu0 0.0
    %943 = vmatprep.subr.mxu0 0.0
    %944 = vmatpush1.xpose.msra.mxu0 0.0
    %945 = vmatprep.subr.mxu0 0.0
    %946 = vmatpush1.xpose.msra.mxu0 0.0
    %947 = vmatprep.subr.mxu0 0.0
    %948 = vmatpush1.xpose.msra.mxu0 0.0
    %949 = vmatprep.subr.mxu0 0.0
    %950 = vmatpush1.xpose.msra.mxu0 0.0
    %951 = vmatprep.subr.mxu0 0.0
    %952 = vmatpush1.xpose.msra.mxu0 0.0
    %953 = vmatprep.subr.mxu0 0.0
    %954 = vmatpush1.xpose.msra.mxu0 0.0
    %955 = vmatprep.subr.mxu0 0.0
    %956 = vmatpush1.xpose.msra.mxu0 0.0
    %957 = vmatprep.mubr.f32.mxu0 0.0
    %958 = vmatmul.mubr.f32.gmra.mrb[0].mxu0 %v892
    %v959 = vpop.f32.mrb[0].mxu0
    %v960 = vadd.f32 0.0, %v959
    %v961 = vpop.f32.mrb[0].mxu0
    %962 = vdwg.mxu0
    %v963 = vlaneseq
    %v964 = vshrl.u32 %v963, 7
    %v965 = vsub.s32 0, %v964
    %v966 = vrot.slane %v960, %v965
    %v967 = vadd.f32 %v888, %v966
    %v968 = vadd.f32 %v890, %v966
    %v969 = vmul.f32 %v967, 0.2
    %v970 = vmul.f32 %v968, 0.2
    %v971 = vmax.f32 %v967, %v969
    %v972 = vmax.f32 %v968, %v970
    %v973 = vadd.f32 %v971, %v45
    %v974 = vadd.f32 %v972, %v46
    %v975 = vsel %vm301, %v973, -inf
    %976 = vmax.xlane.f32.xlu0 %v975
    %v977 = vpop.xlane.xlu0 %976
    %v978 = vsel %vm301, %v974, -inf
    %979 = vmax.xlane.f32.xlu0 %v978
    %v980 = vpop.xlane.xlu0 %979
    %v981 = vsub.f32 %v973, %v977
    %v982 = vsub.f32 %v974, %v980
    %v983 = vmul.f32 %v981, 1.442695
    %v984 = vpow.pop %v983
    %v985 = vmul.f32 %v982, 1.442695
    %v986 = vpow.pop %v985
    %v987 = vsel %vm301, %v984, 0.0
    %988 = vadd.xlane.f32.xlu0 %v987
    %v989 = vpop.xlane.xlu0 %988
    %v990 = vsel %vm301, %v986, 0.0
    %991 = vadd.xlane.f32.xlu0 %v990
    %v992 = vpop.xlane.xlu0 %991
    %v993 = vrcp.pop %v989
    %v994 = vrcp.pop %v992
    %v995 = vmul.f32 %v984, %v993
    %v996 = vmul.f32 %v986, %v994
    %v997 = vpack.c.bf16 %v996, %v995
    %v998 = vpack.c.bf16 %v857, %v853
    %s999 = scalar_lea.vmem %s6, 2
    %v1000 = vld [vmem:[%s999] sm:$0x1]
    %v1002 = vlaneseq
    %v1003 = vshrl.u32 %v1002, 7
    %v1004 = vsub.s32 0, %v1003
    %v1005 = vrot.slane %v1000, %v1004
    %v1008 = vsel %vm301, %v997, 0
    %1010 = vmatprep.subr.bf16.mxu0 0
    %1011 = vmatpush1.bf16.msra.mxu0 %v998
    %1012 = vmatprep.subr.bf16.mxu0 0
    %1013 = vmatpush1.bf16.msra.mxu0 0
    %1014 = vmatprep.subr.bf16.mxu0 0
    %1015 = vmatpush1.bf16.msra.mxu0 0
    %1016 = vmatprep.subr.bf16.mxu0 0
    %1017 = vmatpush1.bf16.msra.mxu0 0
    %1018 = vmatprep.subr.bf16.mxu0 0
    %1019 = vmatpush1.bf16.msra.mxu0 0
    %1020 = vmatprep.subr.bf16.mxu0 0
    %1021 = vmatpush1.bf16.msra.mxu0 0
    %1022 = vmatprep.subr.bf16.mxu0 0
    %1023 = vmatpush1.bf16.msra.mxu0 0
    %1024 = vmatprep.subr.bf16.mxu0 0
    %1025 = vmatpush1.bf16.msra.mxu0 0
    %1026 = vmatprep.subr.bf16.mxu0 0
    %1027 = vmatpush1.bf16.msra.mxu0 0
    %1028 = vmatprep.subr.bf16.mxu0 0
    %1029 = vmatpush1.bf16.msra.mxu0 0
    %1030 = vmatprep.subr.bf16.mxu0 0
    %1031 = vmatpush1.bf16.msra.mxu0 0
    %1032 = vmatprep.subr.bf16.mxu0 0
    %1033 = vmatpush1.bf16.msra.mxu0 0
    %1034 = vmatprep.subr.bf16.mxu0 0
    %1035 = vmatpush1.bf16.msra.mxu0 0
    %1036 = vmatprep.subr.bf16.mxu0 0
    %1037 = vmatpush1.bf16.msra.mxu0 0
    %1038 = vmatprep.subr.bf16.mxu0 0
    %1039 = vmatpush1.bf16.msra.mxu0 0
    %1040 = vmatprep.subr.bf16.mxu0 0
    %1041 = vmatpush1.bf16.msra.mxu0 0
    %1042 = vmatprep.mubr.bf16.mxu0 0
    %1043 = vmatmul.mubr.bf16.gmra.mrb[0].mxu0 %v1008
    %v1044 = vpop.f32.mrb[0].mxu0
    %v1045 = vadd.f32 %v1005, %v1044
    %v1046 = vpop.f32.mrb[0].mxu0
    %v1047 = vpop.f32.mrb[0].mxu0
    %v1048 = vadd.f32 %v1005, %v1047
    %v1049 = vpop.f32.mrb[0].mxu0
    %1050 = vdwg.mxu0
    %v1051 = vadd.f32 %v875, %v1045
    %v1052 = vadd.f32 %v876, %v1048
    %v1053 = vtanh.pop %v1051
    %v1054 = vtanh.pop %v1052
    %v1055 = vld [vmem:[%s2] sm:$0x1]
    %v1057 = vlaneseq
    %v1058 = vshrl.u32 %v1057, 7
    %v1059 = vsub.s32 0, %v1058
    %v1060 = vrot.slane %v1055, %v1059
    %v1062 = vadd.f32 %v1053, %v1060
    %v1063 = vadd.f32 %v1054, %v1060
    %1064 = vmax.xlane.f32.xlu0 %v1062
    %v1065 = vpop.xlane.xlu0 %1064
    %1066 = vmax.xlane.f32.xlu0 %v1063
    %v1067 = vpop.xlane.xlu0 %1066
    %v1068 = vsub.f32 %v1062, %v1065
    %v1069 = vsub.f32 %v1063, %v1067
    %v1070 = vmul.f32 %v1068, 1.442695
    %v1071 = vpow.pop %v1070
    %v1072 = vmul.f32 %v1069, 1.442695
    %v1073 = vpow.pop %v1072
    %1074 = vadd.xlane.f32.xlu0 %v1071
    %v1075 = vpop.xlane.xlu0 %1074
    %1076 = vadd.xlane.f32.xlu0 %v1073
    %v1077 = vpop.xlane.xlu0 %1076
    %v1078 = vlog2.pop %v1075
    %v1079 = vmul.f32 %v1078, 0.6931472
    %v1080 = vlog2.pop %v1077
    %v1081 = vmul.f32 %v1080, 0.6931472
    %v1082 = vsub.f32 %v1068, %v1079
    %v1083 = vsub.f32 %v1069, %v1081
    %1084 = vst [vmem:[%s7] sm:$0xff] %v1082
    %1085 = vst [vmem:[%s7 + $0x8] sm:$0xff] %v1083
    // Predicated region
    $region34: #{gatnet_forward.1} parent=1 // pred_check
      _
    $region35: #{gatnet_forward.1} parent=1 // pred_check_branch
      %1087 = sbr.rel (0) target = $region37
    $region36: #{gatnet_forward.1} parent=1 // pred_region
      _
    $region37: #{gatnet_forward.1} parent=1 // pred_fallthru
      _
    // Predicated region
    $region38: #{gatnet_forward.1} parent=1 // pred_check
      _
    $region39: #{gatnet_forward.1} parent=1 // pred_check_branch
      %1089 = sbr.rel (0) target = $region41
    $region40: #{gatnet_forward.1} parent=1 // pred_region
      _
    $region41: #{gatnet_forward.1} parent=1 // pred_fallthru
      _
    %1090 = vsyncpa [#allocation3], 1

</llo_original>
